<compile_context>
chip_gen: v6e
topology: v6e:2x2x1
jax: 0.10.0
libtpu: 0.0.40
codegen_flags: <defaults>
</compile_context>

<pallas_src>
import jax
import jax.numpy as jnp
from jax.experimental import pallas as pl
from jax.experimental.pallas import tpu as pltpu


def _round_up(x, m):
    return (x + m - 1) // m * m


def _autoencoder_kernel(x_ref,
                        w1, b1, w2, b2, w34, b34, w5, b5, w6, b6,
                        o_ref):
    """Fused 5-matmul (folded) autoencoder forward for one batch tile.

    Weights stay resident in VMEM across grid steps (constant index_map);
    matmuls accumulate in f32 on the MXU; bias-add / ReLU run in f32.
    """
    def layer(h, w_ref, b_ref, relu):
        y = jnp.dot(h.astype(w_ref.dtype), w_ref[...],
                    preferred_element_type=jnp.float32)
        y = y + b_ref[...]                      # bias kept in f32
        return jnp.maximum(y, 0.0) if relu else y

    h = x_ref[...]                              # already in compute dtype
    h = layer(h, w1, b1, True)                  # enc: Linear -> Dropout -> ReLU
    h = layer(h, w2, b2, True)                  # enc: Linear -> Dropout -> ReLU
    h = layer(h, w34, b34, True)                # folded enc L3 + dec L1 (+ReLU)
    h = layer(h, w5, b5, True)                  # dec: Linear -> Dropout -> ReLU
    y = layer(h, w6, b6, False)                 # dec: Linear -> Dropout (no ReLU)

    # TODO(synk): training-mode Dropout(p=0.3) (stochastic masks) is not
    # reproduced; eval-mode (identity) semantics are implemented.
    o_ref[...] = y.astype(o_ref.dtype)


def prepare_params(params, *, compute_dtype=jnp.bfloat16):
    """One-time weight preparation. Call ONCE outside the per-step hot path.

    params = (w1,b1, ..., w6,b6) with weights stored as (in_features,
    out_features) and biases as (1, out_features), i.e. the kernel computes
    y = x @ W + b (same math as PyTorch's x @ W.T + b).

    - folds encoder L3 / decoder L1 (no nonlinearity between them; eval mode)
    - pads the output-feature dim to a multiple of 128 lanes when worthwhile
    - casts matmul operands to compute_dtype; biases stay f32
    """
    w1, b1, w2, b2, w3, b3, w4, b4, w5, b5, w6, b6 = (
        jnp.asarray(p, jnp.float32) for p in params)

    # Fold the two latent layers that have no nonlinearity between them.
    w34 = w3 @ w4
    b34 = b3 @ w4 + b4

    out_dim = w6.shape[1]
    # Lane-dense (unmasked) stores want N % 128 == 0, but for very narrow
    # outputs the zero-pad write amplification dominates -> gate on >= 64.
    if out_dim % 128 != 0 and out_dim >= 64:
        out_pad = _round_up(out_dim, 128)
        w6 = jnp.pad(w6, ((0, 0), (0, out_pad - out_dim)))
        b6 = jnp.pad(b6, ((0, 0), (0, out_pad - out_dim)))

    # TODO(synk): if the model's input width is not 128-aligned and large,
    # padding in_dim (w1 rows + x columns) keeps the first matmul's K
    # lane-aligned; skipped here since in_dim equals the full block dim.

    weights = tuple(w.astype(compute_dtype) for w in (w1, w2, w34, w5, w6))
    biases = tuple((b1, b2, b34, b5, b6))       # stay f32
    return {"weights": weights, "biases": biases, "out_dim": int(out_dim)}


def _choose_tm(batch, block_m):
    """Pick a pack/MXU-aligned batch tile with small tail padding."""
    sub = 16                                    # bf16 packs 16 rows per vreg
    batch_r = _round_up(max(batch, 1), sub)
    if batch_r <= block_m:
        # Batch fits in one tile; split into >=2 tiles of a 128 multiple when
        # large enough (and not padding-wasteful) so a v7x megacore can shard
        # the grid across both TensorCores.
        if batch_r >= 256:
            tm_split = _round_up(pl.cdiv(batch, 2), 128)
            if _round_up(batch, tm_split) <= batch_r + batch_r // 8:
                return tm_split
        return batch_r
    # Large batch: MXU-friendly candidate tiles, minimize tail padding.
    candidates = [c for c in (512, 384, 256, 128) if c <= block_m] or [block_m]
    return min(candidates, key=lambda c: (_round_up(batch, c) - batch, -c))


def autoencoder_forward(x, prepared, *, block_m=512):
    """Eval-mode forward. `prepared` comes from prepare_params()."""
    weights = prepared["weights"]
    biases = prepared["biases"]
    out_dim = prepared["out_dim"]
    compute_dtype = weights[0].dtype
    in_dim = weights[0].shape[0]
    out_pad = weights[-1].shape[1]

    # ---- batch tiling ----
    batch = x.shape[0]
    tm = _choose_tm(batch, block_m)
    batch_pad = _round_up(batch, tm)
    x = x.astype(compute_dtype)
    if batch_pad != batch:
        x = jnp.pad(x, ((0, batch_pad - batch), (0, 0)))
    grid = (batch_pad // tm,)

    in_specs = [pl.BlockSpec((tm, in_dim), lambda i: (i, 0))]
    args = [x]
    for w, b in zip(weights, biases):
        # Full-shape blocks with constant index_map -> resident in VMEM.
        in_specs.append(pl.BlockSpec(w.shape, lambda i: (0, 0)))
        in_specs.append(pl.BlockSpec(b.shape, lambda i: (0, 0)))
        args.append(w)
        args.append(b)

    # ---- VMEM budget: resident params may be double-buffered by the pipeline,
    #      plus double-buffered x/out tiles; add headroom, stay <= 64 MiB. ----
    itemsize = jnp.dtype(compute_dtype).itemsize
    param_bytes = sum(int(a.size) * a.dtype.itemsize for a in args[1:])
    tile_bytes = tm * in_dim * itemsize + tm * out_pad * itemsize
    needed = 2 * (param_bytes + tile_bytes)
    vmem_limit = int(min(max(2 * needed, 32 << 20), 64 << 20))

    flops = 2 * batch_pad * sum(int(w.shape[0]) * int(w.shape[1])
                                for w in weights)
    bytes_accessed = (int(x.size) * x.dtype.itemsize
                      + batch_pad * out_pad * itemsize
                      + param_bytes)

    out = pl.pallas_call(
        _autoencoder_kernel,
        out_shape=jax.ShapeDtypeStruct((batch_pad, out_pad), compute_dtype),
        grid=grid,
        in_specs=in_specs,
        out_specs=pl.BlockSpec((tm, out_pad), lambda i: (i, 0)),
        compiler_params=pltpu.CompilerParams(
            dimension_semantics=("parallel",),
            vmem_limit_bytes=vmem_limit),
        cost_estimate=pl.CostEstimate(
            flops=flops, transcendentals=0, bytes_accessed=bytes_accessed),
    )(*args)

    return out[:batch, :out_dim].astype(jnp.float32)


def init_params(key, input_shape, hidden_shape, latent_shape, output_shape):
    """Deterministic parameter init (uniform, PyTorch-Linear-like scaling)."""
    dims = [
        (input_shape, hidden_shape * 2),
        (hidden_shape * 2, hidden_shape),
        (hidden_shape, latent_shape),
        (latent_shape, hidden_shape),
        (hidden_shape, hidden_shape * 2),
        (hidden_shape * 2, output_shape),
    ]
    params = []
    for i, (fan_in, fan_out) in enumerate(dims):
        kw, kb = jax.random.split(jax.random.fold_in(key, i))
        bound = 1.0 / jnp.sqrt(jnp.float32(fan_in))
        w = jax.random.uniform(kw, (fan_in, fan_out), jnp.float32, -bound, bound)
        b = jax.random.uniform(kb, (1, fan_out), jnp.float32, -bound, bound)
        params += [w, b]
    return tuple(params)


def reference_forward(x, params):
    """Plain-JAX f32 reference of the same eval-mode forward (unfolded)."""
    x = x.astype(jnp.float32)
    w1, b1, w2, b2, w3, b3, w4, b4, w5, b5, w6, b6 = params
    h = jnp.maximum(x @ w1 + b1, 0.0)
    h = jnp.maximum(h @ w2 + b2, 0.0)
    z = h @ w3 + b3
    h = jnp.maximum(z @ w4 + b4, 0.0)
    h = jnp.maximum(h @ w5 + b5, 0.0)
    return h @ w6 + b6


if __name__ == "__main__":
    INPUT, HIDDEN, LATENT, OUTPUT = 32, 16, 8, 32
    BATCH = 8

    key = jax.random.PRNGKey(0)
    kx, kp = jax.random.split(key)
    x = jax.random.normal(kx, (BATCH, INPUT), jnp.float32)
    params = init_params(kp, INPUT, HIDDEN, LATENT, OUTPUT)

    ref = reference_forward(x, params)

    # f32 compute path: tight agreement with the unfolded reference.
    prep_f32 = prepare_params(params, compute_dtype=jnp.float32)
    out_f32 = jax.block_until_ready(autoencoder_forward(x, prep_f32))
    assert out_f32.shape == (BATCH, OUTPUT)
    assert jnp.allclose(out_f32, ref, atol=1e-4, rtol=1e-4)

    # default path: bf16 matmul operands + bf16 output, f32 accumulation.
    prep_bf16 = prepare_params(params)          # prepared ONCE, reused per call
    out_bf16 = jax.block_until_ready(autoencoder_forward(x, prep_bf16))
    assert out_bf16.shape == (BATCH, OUTPUT)
    assert jnp.allclose(out_bf16, ref, atol=6e-2, rtol=6e-2)

    print("KERNEL_OK")
</pallas_src>

<mosaic_0001>
module attributes {stable_mosaic.version = 11 : i64} {
  func.func @_autoencoder_kernel(%arg0: i32, %arg1: memref<16x32xf32, #tpu.memory_space<vmem>>, %arg2: memref<32x32xf32, #tpu.memory_space<vmem>>, %arg3: memref<1x32xf32, #tpu.memory_space<vmem>>, %arg4: memref<32x16xf32, #tpu.memory_space<vmem>>, %arg5: memref<1x16xf32, #tpu.memory_space<vmem>>, %arg6: memref<16x16xf32, #tpu.memory_space<vmem>>, %arg7: memref<1x16xf32, #tpu.memory_space<vmem>>, %arg8: memref<16x32xf32, #tpu.memory_space<vmem>>, %arg9: memref<1x32xf32, #tpu.memory_space<vmem>>, %arg10: memref<32x32xf32, #tpu.memory_space<vmem>>, %arg11: memref<1x32xf32, #tpu.memory_space<vmem>>, %arg12: memref<16x32xf32, #tpu.memory_space<vmem>>) attributes {dimension_semantics = [#tpu.dimension_semantics<parallel>], iteration_bounds = array<i64: 1>, scalar_prefetch = 0 : i64, scratch_operands = 0 : i64, tpu.core_type = #tpu.core_type<tc>, window_params = [{transform_indices = @transform_0, window_bounds = array<i64: 16, 32>}, {pipeline_mode = #tpu.pipeline_mode<synchronous>, transform_indices = @transform_1, window_bounds = array<i64: 32, 32>}, {pipeline_mode = #tpu.pipeline_mode<synchronous>, transform_indices = @transform_2, window_bounds = array<i64: 1, 32>}, {pipeline_mode = #tpu.pipeline_mode<synchronous>, transform_indices = @transform_3, window_bounds = array<i64: 32, 16>}, {pipeline_mode = #tpu.pipeline_mode<synchronous>, transform_indices = @transform_4, window_bounds = array<i64: 1, 16>}, {pipeline_mode = #tpu.pipeline_mode<synchronous>, transform_indices = @transform_5, window_bounds = array<i64: 16, 16>}, {pipeline_mode = #tpu.pipeline_mode<synchronous>, transform_indices = @transform_6, window_bounds = array<i64: 1, 16>}, {pipeline_mode = #tpu.pipeline_mode<synchronous>, transform_indices = @transform_7, window_bounds = array<i64: 16, 32>}, {pipeline_mode = #tpu.pipeline_mode<synchronous>, transform_indices = @transform_8, window_bounds = array<i64: 1, 32>}, {pipeline_mode = #tpu.pipeline_mode<synchronous>, transform_indices = @transform_9, window_bounds = array<i64: 32, 32>}, {pipeline_mode = #tpu.pipeline_mode<synchronous>, transform_indices = @transform_10, window_bounds = array<i64: 1, 32>}, {transform_indices = @transform_11, window_bounds = array<i64: 16, 32>}]} {
    %c0 = arith.constant 0 : index
    %c0_0 = arith.constant 0 : index
    %0 = vector.load %arg1[%c0, %c0_0] : memref<16x32xf32, #tpu.memory_space<vmem>>, vector<16x32xf32>
    %c0_1 = arith.constant 0 : index
    %c0_2 = arith.constant 0 : index
    %1 = vector.load %arg2[%c0_1, %c0_2] : memref<32x32xf32, #tpu.memory_space<vmem>>, vector<32x32xf32>
    %cst = arith.constant dense<0.000000e+00> : vector<16x32xf32>
    %2 = tpu.matmul %0, %1, %cst {dimension_numbers = #tpu.dot_dimension_numbers<[1], [0], [0], [1], [0, 0, 1, 1], [], []>} : vector<16x32xf32>, vector<32x32xf32>, vector<16x32xf32> -> vector<16x32xf32>
    %c0_3 = arith.constant 0 : index
    %c0_4 = arith.constant 0 : index
    %3 = vector.load %arg3[%c0_3, %c0_4] : memref<1x32xf32, #tpu.memory_space<vmem>>, vector<1x32xf32>
    %4 = vector.broadcast %3 : vector<1x32xf32> to vector<16x32xf32>
    %5 = arith.addf %2, %4 : vector<16x32xf32>
    %cst_5 = arith.constant 0.000000e+00 : f32
    %6 = vector.broadcast %cst_5 : f32 to vector<16x32xf32>
    %7 = arith.maximumf %5, %6 : vector<16x32xf32>
    %c0_6 = arith.constant 0 : index
    %c0_7 = arith.constant 0 : index
    %8 = vector.load %arg4[%c0_6, %c0_7] : memref<32x16xf32, #tpu.memory_space<vmem>>, vector<32x16xf32>
    %cst_8 = arith.constant dense<0.000000e+00> : vector<16x16xf32>
    %9 = tpu.matmul %7, %8, %cst_8 {dimension_numbers = #tpu.dot_dimension_numbers<[1], [0], [0], [1], [0, 0, 1, 1], [], []>} : vector<16x32xf32>, vector<32x16xf32>, vector<16x16xf32> -> vector<16x16xf32>
    %c0_9 = arith.constant 0 : index
    %c0_10 = arith.constant 0 : index
    %10 = vector.load %arg5[%c0_9, %c0_10] : memref<1x16xf32, #tpu.memory_space<vmem>>, vector<1x16xf32>
    %11 = vector.broadcast %10 : vector<1x16xf32> to vector<16x16xf32>
    %12 = arith.addf %9, %11 : vector<16x16xf32>
    %cst_11 = arith.constant 0.000000e+00 : f32
    %13 = vector.broadcast %cst_11 : f32 to vector<16x16xf32>
    %14 = arith.maximumf %12, %13 : vector<16x16xf32>
    %c0_12 = arith.constant 0 : index
    %c0_13 = arith.constant 0 : index
    %15 = vector.load %arg6[%c0_12, %c0_13] : memref<16x16xf32, #tpu.memory_space<vmem>>, vector<16x16xf32>
    %cst_14 = arith.constant dense<0.000000e+00> : vector<16x16xf32>
    %16 = tpu.matmul %14, %15, %cst_14 {dimension_numbers = #tpu.dot_dimension_numbers<[1], [0], [0], [1], [0, 0, 1, 1], [], []>} : vector<16x16xf32>, vector<16x16xf32>, vector<16x16xf32> -> vector<16x16xf32>
    %c0_15 = arith.constant 0 : index
    %c0_16 = arith.constant 0 : index
    %17 = vector.load %arg7[%c0_15, %c0_16] : memref<1x16xf32, #tpu.memory_space<vmem>>, vector<1x16xf32>
    %18 = vector.broadcast %17 : vector<1x16xf32> to vector<16x16xf32>
    %19 = arith.addf %16, %18 : vector<16x16xf32>
    %cst_17 = arith.constant 0.000000e+00 : f32
    %20 = vector.broadcast %cst_17 : f32 to vector<16x16xf32>
    %21 = arith.maximumf %19, %20 : vector<16x16xf32>
    %c0_18 = arith.constant 0 : index
    %c0_19 = arith.constant 0 : index
    %22 = vector.load %arg8[%c0_18, %c0_19] : memref<16x32xf32, #tpu.memory_space<vmem>>, vector<16x32xf32>
    %cst_20 = arith.constant dense<0.000000e+00> : vector<16x32xf32>
    %23 = tpu.matmul %21, %22, %cst_20 {dimension_numbers = #tpu.dot_dimension_numbers<[1], [0], [0], [1], [0, 0, 1, 1], [], []>} : vector<16x16xf32>, vector<16x32xf32>, vector<16x32xf32> -> vector<16x32xf32>
    %c0_21 = arith.constant 0 : index
    %c0_22 = arith.constant 0 : index
    %24 = vector.load %arg9[%c0_21, %c0_22] : memref<1x32xf32, #tpu.memory_space<vmem>>, vector<1x32xf32>
    %25 = vector.broadcast %24 : vector<1x32xf32> to vector<16x32xf32>
    %26 = arith.addf %23, %25 : vector<16x32xf32>
    %cst_23 = arith.constant 0.000000e+00 : f32
    %27 = vector.broadcast %cst_23 : f32 to vector<16x32xf32>
    %28 = arith.maximumf %26, %27 : vector<16x32xf32>
    %c0_24 = arith.constant 0 : index
    %c0_25 = arith.constant 0 : index
    %29 = vector.load %arg10[%c0_24, %c0_25] : memref<32x32xf32, #tpu.memory_space<vmem>>, vector<32x32xf32>
    %cst_26 = arith.constant dense<0.000000e+00> : vector<16x32xf32>
    %30 = tpu.matmul %28, %29, %cst_26 {dimension_numbers = #tpu.dot_dimension_numbers<[1], [0], [0], [1], [0, 0, 1, 1], [], []>} : vector<16x32xf32>, vector<32x32xf32>, vector<16x32xf32> -> vector<16x32xf32>
    %c0_27 = arith.constant 0 : index
    %c0_28 = arith.constant 0 : index
    %31 = vector.load %arg11[%c0_27, %c0_28] : memref<1x32xf32, #tpu.memory_space<vmem>>, vector<1x32xf32>
    %32 = vector.broadcast %31 : vector<1x32xf32> to vector<16x32xf32>
    %33 = arith.addf %30, %32 : vector<16x32xf32>
    %c0_29 = arith.constant 0 : index
    %c0_30 = arith.constant 0 : index
    %34 = vector.load %arg12[%c0_29, %c0_30] : memref<16x32xf32, #tpu.memory_space<vmem>>, vector<16x32xf32>
    tpu.vector_store %arg12[%c0_29, %c0_30], %33 {strides = array<i32>} : memref<16x32xf32, #tpu.memory_space<vmem>>, vector<16x32xf32>,
    return
  }
  func.func @transform_0(%arg0: i32) -> (i32, i32) {
    %c0_i32 = arith.constant 0 : i32
    %c0_i32_0 = arith.constant 0 : i32
    return %arg0, %c0_i32 : i32, i32
  }
  func.func @transform_1(%arg0: i32) -> (i32, i32) {
    %c0_i32 = arith.constant 0 : i32
    %c0_i32_0 = arith.constant 0 : i32
    %c0_i32_1 = arith.constant 0 : i32
    return %c0_i32, %c0_i32_0 : i32, i32
  }
  func.func @transform_2(%arg0: i32) -> (i32, i32) {
    %c0_i32 = arith.constant 0 : i32
    %c0_i32_0 = arith.constant 0 : i32
    %c0_i32_1 = arith.constant 0 : i32
    return %c0_i32, %c0_i32_0 : i32, i32
  }
  func.func @transform_3(%arg0: i32) -> (i32, i32) {
    %c0_i32 = arith.constant 0 : i32
    %c0_i32_0 = arith.constant 0 : i32
    %c0_i32_1 = arith.constant 0 : i32
    return %c0_i32, %c0_i32_0 : i32, i32
  }
  func.func @transform_4(%arg0: i32) -> (i32, i32) {
    %c0_i32 = arith.constant 0 : i32
    %c0_i32_0 = arith.constant 0 : i32
    %c0_i32_1 = arith.constant 0 : i32
    return %c0_i32, %c0_i32_0 : i32, i32
  }
  func.func @transform_5(%arg0: i32) -> (i32, i32) {
    %c0_i32 = arith.constant 0 : i32
    %c0_i32_0 = arith.constant 0 : i32
    %c0_i32_1 = arith.constant 0 : i32
    return %c0_i32, %c0_i32_0 : i32, i32
  }
  func.func @transform_6(%arg0: i32) -> (i32, i32) {
    %c0_i32 = arith.constant 0 : i32
    %c0_i32_0 = arith.constant 0 : i32
    %c0_i32_1 = arith.constant 0 : i32
    return %c0_i32, %c0_i32_0 : i32, i32
  }
  func.func @transform_7(%arg0: i32) -> (i32, i32) {
    %c0_i32 = arith.constant 0 : i32
    %c0_i32_0 = arith.constant 0 : i32
    %c0_i32_1 = arith.constant 0 : i32
    return %c0_i32, %c0_i32_0 : i32, i32
  }
  func.func @transform_8(%arg0: i32) -> (i32, i32) {
    %c0_i32 = arith.constant 0 : i32
    %c0_i32_0 = arith.constant 0 : i32
    %c0_i32_1 = arith.constant 0 : i32
    return %c0_i32, %c0_i32_0 : i32, i32
  }
  func.func @transform_9(%arg0: i32) -> (i32, i32) {
    %c0_i32 = arith.constant 0 : i32
    %c0_i32_0 = arith.constant 0 : i32
    %c0_i32_1 = arith.constant 0 : i32
    return %c0_i32, %c0_i32_0 : i32, i32
  }
  func.func @transform_10(%arg0: i32) -> (i32, i32) {
    %c0_i32 = arith.constant 0 : i32
    %c0_i32_0 = arith.constant 0 : i32
    %c0_i32_1 = arith.constant 0 : i32
    return %c0_i32, %c0_i32_0 : i32, i32
  }
  func.func @transform_11(%arg0: i32) -> (i32, i32) {
    %c0_i32 = arith.constant 0 : i32
    %c0_i32_0 = arith.constant 0 : i32
    return %arg0, %c0_i32 : i32, i32
  }
}

</mosaic_0001>

<llo_original>
// kernel: tpu_custom_call.1
$region0: #{tpu_custom_call.1}
  #allocation0 [shape = 'u32[]', space=smem, size = 0x4, offset = 0x4, fixed_abs, tag = 'smem constant byte address 0x4 - core index']
  #allocation1 [shape = 'u32[144,128]{1,0:T(1,128)}', space=vmem, size = 0x12000, scoped, tag = 'internal scratch']
  %s0 = inlined_call_operand.hbm [shape: f32[16,32], index: 0, kind: input, shape index: {}]
  %s1 = inlined_call_operand.vmem [shape: f32[32,32], index: 1, kind: input, shape index: {}]
  %s2 = inlined_call_operand.hbm [shape: f32[1,32], index: 2, kind: input, shape index: {}]
  %s3 = inlined_call_operand.vmem [shape: f32[32,16], index: 3, kind: input, shape index: {}]
  %s4 = inlined_call_operand.hbm [shape: f32[1,16], index: 4, kind: input, shape index: {}]
  %s5 = inlined_call_operand.hbm [shape: f32[16,16], index: 5, kind: input, shape index: {}]
  %s6 = inlined_call_operand.hbm [shape: f32[1,16], index: 6, kind: input, shape index: {}]
  %s7 = inlined_call_operand.hbm [shape: f32[16,32], index: 7, kind: input, shape index: {}]
  %s8 = inlined_call_operand.hbm [shape: f32[1,32], index: 8, kind: input, shape index: {}]
  %s9 = inlined_call_operand.vmem [shape: f32[32,32], index: 9, kind: input, shape index: {}]
  %s10 = inlined_call_operand.vmem [shape: f32[1,32], index: 10, kind: input, shape index: {}]
  %s11 = inlined_call_operand.hbm [shape: f32[16,32], index: 11, kind: output, shape index: {}]
  %s12 = sld [smem:[#allocation0]]
  $region82: #{tpu_custom_call.1} parent=0
    _
  %s14 = ssub.s32 1, %s12
  %s15 = scalar_select 0, %s14, %s12
  $region1: #{tpu_custom_call.1} parent=0
    #allocation2 [shape = 'u8[8192]{0}', space=vmem, size = 0x2000, scoped, tag = 'input window, operand 0, single buffered']
    #allocation3 [shape = 's32[1]{0}', space=sflag, size = 0x4, scoped, tag = 'scoped memory for tpu_custom_call.1']
    #allocation4 [shape = 's32[1]{0}', space=sflag, size = 0x4, scoped, tag = 'scoped memory for tpu_custom_call.1']
    #allocation5 [shape = 'u8[512]{0}', space=vmem, size = 0x400, scoped, tag = 'input window, operand 2, single buffered']
    #allocation6 [shape = 's32[1]{0}', space=sflag, size = 0x4, scoped, tag = 'scoped memory for tpu_custom_call.1']
    #allocation7 [shape = 'u8[512]{0}', space=vmem, size = 0x400, scoped, tag = 'input window, operand 4, single buffered']
    #allocation8 [shape = 'u8[8192]{0}', space=vmem, size = 0x2000, scoped, tag = 'input window, operand 5, single buffered']
    #allocation9 [shape = 's32[1]{0}', space=sflag, size = 0x4, scoped, tag = 'scoped memory for tpu_custom_call.1']
    #allocation10 [shape = 'u8[512]{0}', space=vmem, size = 0x400, scoped, tag = 'input window, operand 6, single buffered']
    #allocation11 [shape = 'u8[8192]{0}', space=vmem, size = 0x2000, scoped, tag = 'input window, operand 7, single buffered']
    #allocation12 [shape = 's32[1]{0}', space=sflag, size = 0x4, scoped, tag = 'scoped memory for tpu_custom_call.1']
    #allocation13 [shape = 'u8[512]{0}', space=vmem, size = 0x400, scoped, tag = 'input window, operand 8, single buffered']
    #allocation14 [shape = 'u8[8192]{0}', space=vmem, size = 0x2000, scoped, tag = 'output window, operand 0, single buffered']
    %16 = vsyncpa [#allocation3], 0
    %17 = vsyncpa [#allocation6], 0
    %18 = vsyncpa [#allocation9], 0
    %19 = vsyncpa [#allocation12], 0
    %20 = vsyncpa [#allocation4], 0
    // Predicated region
    $region2: #{tpu_custom_call.1} parent=1 // pred_check
      _
    $region3: #{tpu_custom_call.1} parent=1 // pred_check_branch
      %22 = sbr.rel (0) target = $region5
    $region4: #{tpu_custom_call.1} parent=1 // pred_region
      %s24 = ssub.s32 256, 256
      %25 = vsyncadd [#allocation3], %s24
      %s26 = sshll.u32 [#allocation2], 4
      %s27 = int_to_ptr.vmem [resolvable:$true] %s26
      %32 = dma.hbm_to_vmem [thread:$0]  %s0, 256, %s27, [#allocation3], 128, 128, 8
    $region5: #{tpu_custom_call.1} parent=1 // pred_fallthru
      _
    // Predicated region
    $region6: #{tpu_custom_call.1} parent=1 // pred_check
      _
    $region7: #{tpu_custom_call.1} parent=1 // pred_check_branch
      %34 = sbr.rel (0) target = $region9
    $region8: #{tpu_custom_call.1} parent=1 // pred_region
      _
    $region9: #{tpu_custom_call.1} parent=1 // pred_fallthru
      _
    // Predicated region
    $region10: #{tpu_custom_call.1} parent=1 // pred_check
      _
    $region11: #{tpu_custom_call.1} parent=1 // pred_check_branch
      %36 = sbr.rel (0) target = $region13
    $region12: #{tpu_custom_call.1} parent=1 // pred_region
      %s38 = ssub.s32 16, 16
      %39 = vsyncadd [#allocation6], %s38
      %s41 = sshll.u32 [#allocation5], 4
      %s42 = int_to_ptr.vmem [resolvable:$true] %s41
      %44 = dma.hbm_to_vmem [thread:$0]  %s2, 16, %s42, [#allocation6]
    $region13: #{tpu_custom_call.1} parent=1 // pred_fallthru
      _
    // Predicated region
    $region14: #{tpu_custom_call.1} parent=1 // pred_check
      _
    $region15: #{tpu_custom_call.1} parent=1 // pred_check_branch
      %46 = sbr.rel (0) target = $region17
    $region16: #{tpu_custom_call.1} parent=1 // pred_region
      _
    $region17: #{tpu_custom_call.1} parent=1 // pred_fallthru
      _
    // Predicated region
    $region18: #{tpu_custom_call.1} parent=1 // pred_check
      _
    $region19: #{tpu_custom_call.1} parent=1 // pred_check_branch
      %48 = sbr.rel (0) target = $region21
    $region20: #{tpu_custom_call.1} parent=1 // pred_region
      %s50 = ssub.s32 16, 16
      %51 = vsyncadd [#allocation6], %s50
      %s53 = sshll.u32 [#allocation7], 4
      %s54 = int_to_ptr.vmem [resolvable:$true] %s53
      %56 = dma.hbm_to_vmem [thread:$0]  %s4, 16, %s54, [#allocation6]
    $region21: #{tpu_custom_call.1} parent=1 // pred_fallthru
      _
    // Predicated region
    $region22: #{tpu_custom_call.1} parent=1 // pred_check
      _
    $region23: #{tpu_custom_call.1} parent=1 // pred_check_branch
      %58 = sbr.rel (0) target = $region25
    $region24: #{tpu_custom_call.1} parent=1 // pred_region
      %s60 = ssub.s32 256, 256
      %61 = vsyncadd [#allocation9], %s60
      %s62 = sshll.u32 [#allocation8], 4
      %s63 = int_to_ptr.vmem [resolvable:$true] %s62
      %68 = dma.hbm_to_vmem [thread:$0]  %s5, 256, %s63, [#allocation9], 128, 128, 8
    $region25: #{tpu_custom_call.1} parent=1 // pred_fallthru
      _
    // Predicated region
    $region26: #{tpu_custom_call.1} parent=1 // pred_check
      _
    $region27: #{tpu_custom_call.1} parent=1 // pred_check_branch
      %70 = sbr.rel (0) target = $region29
    $region28: #{tpu_custom_call.1} parent=1 // pred_region
      %s72 = ssub.s32 16, 16
      %73 = vsyncadd [#allocation9], %s72
      %s75 = sshll.u32 [#allocation10], 4
      %s76 = int_to_ptr.vmem [resolvable:$true] %s75
      %78 = dma.hbm_to_vmem [thread:$0]  %s6, 16, %s76, [#allocation9]
    $region29: #{tpu_custom_call.1} parent=1 // pred_fallthru
      _
    // Predicated region
    $region30: #{tpu_custom_call.1} parent=1 // pred_check
      _
    $region31: #{tpu_custom_call.1} parent=1 // pred_check_branch
      %80 = sbr.rel (0) target = $region33
    $region32: #{tpu_custom_call.1} parent=1 // pred_region
      %s82 = ssub.s32 256, 256
      %83 = vsyncadd [#allocation12], %s82
      %s84 = sshll.u32 [#allocation11], 4
      %s85 = int_to_ptr.vmem [resolvable:$true] %s84
      %90 = dma.hbm_to_vmem [thread:$0]  %s7, 256, %s85, [#allocation12], 128, 128, 8
    $region33: #{tpu_custom_call.1} parent=1 // pred_fallthru
      _
    // Predicated region
    $region34: #{tpu_custom_call.1} parent=1 // pred_check
      _
    $region35: #{tpu_custom_call.1} parent=1 // pred_check_branch
      %92 = sbr.rel (0) target = $region37
    $region36: #{tpu_custom_call.1} parent=1 // pred_region
      %s94 = ssub.s32 16, 16
      %95 = vsyncadd [#allocation12], %s94
      %s97 = sshll.u32 [#allocation13], 4
      %s98 = int_to_ptr.vmem [resolvable:$true] %s97
      %100 = dma.hbm_to_vmem [thread:$0]  %s8, 16, %s98, [#allocation12]
    $region37: #{tpu_custom_call.1} parent=1 // pred_fallthru
      _
    // Predicated region
    $region38: #{tpu_custom_call.1} parent=1 // pred_check
      _
    $region39: #{tpu_custom_call.1} parent=1 // pred_check_branch
      %102 = sbr.rel (0) target = $region41
    $region40: #{tpu_custom_call.1} parent=1 // pred_region
      _
    $region41: #{tpu_custom_call.1} parent=1 // pred_fallthru
      _
    // Predicated region
    $region42: #{tpu_custom_call.1} parent=1 // pred_check
      _
    $region43: #{tpu_custom_call.1} parent=1 // pred_check_branch
      %104 = sbr.rel (0) target = $region45
    $region44: #{tpu_custom_call.1} parent=1 // pred_region
      _
    $region45: #{tpu_custom_call.1} parent=1 // pred_fallthru
      _
    // Predicated region
    $region46: #{tpu_custom_call.1} parent=1 // pred_check
      _
    $region47: #{tpu_custom_call.1} parent=1 // pred_check_branch
      %106 = sbr.rel (0) target = $region49
    $region48: #{tpu_custom_call.1} parent=1 // pred_region
      %107 = dma.done [#allocation3], 256
    $region49: #{tpu_custom_call.1} parent=1 // pred_fallthru
      _
    // Predicated region
    $region50: #{tpu_custom_call.1} parent=1 // pred_check
      _
    $region51: #{tpu_custom_call.1} parent=1 // pred_check_branch
      %109 = sbr.rel (0) target = $region53
    $region52: #{tpu_custom_call.1} parent=1 // pred_region
      %110 = dma.done [#allocation6], 16
    $region53: #{tpu_custom_call.1} parent=1 // pred_fallthru
      _
    // Predicated region
    $region54: #{tpu_custom_call.1} parent=1 // pred_check
      _
    $region55: #{tpu_custom_call.1} parent=1 // pred_check_branch
      %112 = sbr.rel (0) target = $region57
    $region56: #{tpu_custom_call.1} parent=1 // pred_region
      %113 = dma.done [#allocation6], 16
    $region57: #{tpu_custom_call.1} parent=1 // pred_fallthru
      _
    // Predicated region
    $region58: #{tpu_custom_call.1} parent=1 // pred_check
      _
    $region59: #{tpu_custom_call.1} parent=1 // pred_check_branch
      %115 = sbr.rel (0) target = $region61
    $region60: #{tpu_custom_call.1} parent=1 // pred_region
      %116 = dma.done [#allocation9], 256
    $region61: #{tpu_custom_call.1} parent=1 // pred_fallthru
      _
    // Predicated region
    $region62: #{tpu_custom_call.1} parent=1 // pred_check
      _
    $region63: #{tpu_custom_call.1} parent=1 // pred_check_branch
      %118 = sbr.rel (0) target = $region65
    $region64: #{tpu_custom_call.1} parent=1 // pred_region
      %119 = dma.done [#allocation9], 16
    $region65: #{tpu_custom_call.1} parent=1 // pred_fallthru
      _
    // Predicated region
    $region66: #{tpu_custom_call.1} parent=1 // pred_check
      _
    $region67: #{tpu_custom_call.1} parent=1 // pred_check_branch
      %121 = sbr.rel (0) target = $region69
    $region68: #{tpu_custom_call.1} parent=1 // pred_region
      %122 = dma.done [#allocation12], 256
    $region69: #{tpu_custom_call.1} parent=1 // pred_fallthru
      _
    // Predicated region
    $region70: #{tpu_custom_call.1} parent=1 // pred_check
      _
    $region71: #{tpu_custom_call.1} parent=1 // pred_check_branch
      %124 = sbr.rel (0) target = $region73
    $region72: #{tpu_custom_call.1} parent=1 // pred_region
      %125 = dma.done [#allocation12], 16
    $region73: #{tpu_custom_call.1} parent=1 // pred_fallthru
      _
    %v126 = vld [vmem:[#allocation2] sm:$0xff]
    %v127 = vld [vmem:[#allocation2 + $0x8] sm:$0xff]
    %v128 = vld [vmem:[%s1] sm:$0xff]
    %v129 = vld [vmem:[%s1 + $0x8] sm:$0xff]
    %v130 = vld [vmem:[%s1 + $0x10] sm:$0xff]
    %v131 = vld [vmem:[%s1 + $0x18] sm:$0xff]
    %v132 = vld [vmem:[#allocation5] sm:$0x1]
    %v134 = vlaneseq
    %v135 = vshrl.u32 %v134, 7
    %v136 = vsub.s32 0, %v135
    %v137 = vrot.slane %v132, %v136
    %vm139 = vcmask 261120
    %v141 = vsel %vm139, %v126, 0
    %v144 = vsel %vm139, %v127, 0
    %146 = vmatprep.subr.mxu0 0.0
    %147 = vmatpush1.msra.mxu0 0.0
    %148 = vmatprep.subr.mxu0 0.0
    %149 = vmatpush1.msra.mxu0 0.0
    %150 = vmatprep.subr.mxu0 0.0
    %151 = vmatpush1.msra.mxu0 0.0
    %152 = vmatprep.subr.mxu0 0.0
    %153 = vmatpush1.msra.mxu0 0.0
    %154 = vmatprep.subr.mxu0 0.0
    %155 = vmatpush1.msra.mxu0 0.0
    %156 = vmatprep.subr.mxu0 0.0
    %157 = vmatpush1.msra.mxu0 0.0
    %158 = vmatprep.subr.mxu0 0.0
    %159 = vmatpush1.msra.mxu0 0.0
    %160 = vmatprep.subr.mxu0 0.0
    %161 = vmatpush1.msra.mxu0 0.0
    %162 = vmatprep.subr.mxu0 0.0
    %163 = vmatpush1.msra.mxu0 0.0
    %164 = vmatprep.subr.mxu0 0.0
    %165 = vmatpush1.msra.mxu0 0.0
    %166 = vmatprep.subr.mxu0 0.0
    %167 = vmatpush1.msra.mxu0 0.0
    %168 = vmatprep.subr.mxu0 0.0
    %169 = vmatpush1.msra.mxu0 0.0
    %170 = vmatprep.subr.mxu0 0.0
    %171 = vmatpush1.msra.mxu0 %v131
    %172 = vmatprep.subr.mxu0 0.0
    %173 = vmatpush1.msra.mxu0 %v130
    %174 = vmatprep.subr.mxu0 0.0
    %175 = vmatpush1.msra.mxu0 %v129
    %176 = vmatprep.subr.mxu0 0.0
    %177 = vmatpush1.msra.mxu0 %v128
    %178 = vmatprep.subr.mxu0 0.0
    %179 = vmatpush2.msra.mxu0 0.0
    %180 = vmatprep.subr.mxu0 0.0
    %181 = vmatpush2.msra.mxu0 0.0
    %182 = vmatprep.subr.mxu0 0.0
    %183 = vmatpush2.msra.mxu0 0.0
    %184 = vmatprep.subr.mxu0 0.0
    %185 = vmatpush2.msra.mxu0 0.0
    %186 = vmatprep.subr.mxu0 0.0
    %187 = vmatpush2.msra.mxu0 0.0
    %188 = vmatprep.subr.mxu0 0.0
    %189 = vmatpush2.msra.mxu0 0.0
    %190 = vmatprep.subr.mxu0 0.0
    %191 = vmatpush2.msra.mxu0 0.0
    %192 = vmatprep.subr.mxu0 0.0
    %193 = vmatpush2.msra.mxu0 0.0
    %194 = vmatprep.subr.mxu0 0.0
    %195 = vmatpush2.msra.mxu0 0.0
    %196 = vmatprep.subr.mxu0 0.0
    %197 = vmatpush2.msra.mxu0 0.0
    %198 = vmatprep.subr.mxu0 0.0
    %199 = vmatpush2.msra.mxu0 0.0
    %200 = vmatprep.subr.mxu0 0.0
    %201 = vmatpush2.msra.mxu0 0.0
    %202 = vmatprep.subr.mxu0 0.0
    %203 = vmatpush2.msra.mxu0 0.0
    %204 = vmatprep.subr.mxu0 0.0
    %205 = vmatpush2.msra.mxu0 0.0
    %206 = vmatprep.subr.mxu0 0.0
    %207 = vmatpush2.msra.mxu0 0.0
    %208 = vmatprep.subr.mxu0 0.0
    %209 = vmatpush2.msra.mxu0 0.0
    %210 = vmatprep.mubr.f32.mxu0 0.0
    %211 = vmatmul.mubr.f32.gmra.mxu0 %v141
    %v212 = vpop.f32.mrf.mxu0
    %v213 = vadd.f32 %v137, %v212
    %v214 = vpop.f32.mrf.mxu0
    %215 = vmatprep.mubr.f32.mxu0 0.0
    %216 = vmatmul.mubr.f32.gmra.mxu0 %v144
    %v217 = vpop.f32.mrf.mxu0
    %v218 = vadd.f32 %v137, %v217
    %v219 = vpop.f32.mrf.mxu0
    %220 = vdwg.mxu0
    %v221 = vmax.f32 %v213, 0.0
    %v222 = vmax.f32 %v218, 0.0
    %v223 = vld [vmem:[%s3] sm:$0xff]
    %v224 = vld [vmem:[%s3 + $0x8] sm:$0xff]
    %v225 = vld [vmem:[%s3 + $0x10] sm:$0xff]
    %v226 = vld [vmem:[%s3 + $0x18] sm:$0xff]
    %v227 = vld [vmem:[#allocation7] sm:$0x1]
    %v229 = vlaneseq
    %v230 = vshrl.u32 %v229, 7
    %v231 = vsub.s32 0, %v230
    %v232 = vrot.slane %v227, %v231
    %v235 = vsel %vm139, %v221, 0
    %v238 = vsel %vm139, %v222, 0
    %240 = vmatprep.subr.mxu0 0.0
    %241 = vmatpush1.msra.mxu0 0.0
    %242 = vmatprep.subr.mxu0 0.0
    %243 = vmatpush1.msra.mxu0 0.0
    %244 = vmatprep.subr.mxu0 0.0
    %245 = vmatpush1.msra.mxu0 0.0
    %246 = vmatprep.subr.mxu0 0.0
    %247 = vmatpush1.msra.mxu0 0.0
    %248 = vmatprep.subr.mxu0 0.0
    %249 = vmatpush1.msra.mxu0 0.0
    %250 = vmatprep.subr.mxu0 0.0
    %251 = vmatpush1.msra.mxu0 0.0
    %252 = vmatprep.subr.mxu0 0.0
    %253 = vmatpush1.msra.mxu0 0.0
    %254 = vmatprep.subr.mxu0 0.0
    %255 = vmatpush1.msra.mxu0 0.0
    %256 = vmatprep.subr.mxu0 0.0
    %257 = vmatpush1.msra.mxu0 0.0
    %258 = vmatprep.subr.mxu0 0.0
    %259 = vmatpush1.msra.mxu0 0.0
    %260 = vmatprep.subr.mxu0 0.0
    %261 = vmatpush1.msra.mxu0 0.0
    %262 = vmatprep.subr.mxu0 0.0
    %263 = vmatpush1.msra.mxu0 0.0
    %264 = vmatprep.subr.mxu0 0.0
    %265 = vmatpush1.msra.mxu0 %v226
    %266 = vmatprep.subr.mxu0 0.0
    %267 = vmatpush1.msra.mxu0 %v225
    %268 = vmatprep.subr.mxu0 0.0
    %269 = vmatpush1.msra.mxu0 %v224
    %270 = vmatprep.subr.mxu0 0.0
    %271 = vmatpush1.msra.mxu0 %v223
    %272 = vmatprep.subr.mxu0 0.0
    %273 = vmatpush2.msra.mxu0 0.0
    %274 = vmatprep.subr.mxu0 0.0
    %275 = vmatpush2.msra.mxu0 0.0
    %276 = vmatprep.subr.mxu0 0.0
    %277 = vmatpush2.msra.mxu0 0.0
    %278 = vmatprep.subr.mxu0 0.0
    %279 = vmatpush2.msra.mxu0 0.0
    %280 = vmatprep.subr.mxu0 0.0
    %281 = vmatpush2.msra.mxu0 0.0
    %282 = vmatprep.subr.mxu0 0.0
    %283 = vmatpush2.msra.mxu0 0.0
    %284 = vmatprep.subr.mxu0 0.0
    %285 = vmatpush2.msra.mxu0 0.0
    %286 = vmatprep.subr.mxu0 0.0
    %287 = vmatpush2.msra.mxu0 0.0
    %288 = vmatprep.subr.mxu0 0.0
    %289 = vmatpush2.msra.mxu0 0.0
    %290 = vmatprep.subr.mxu0 0.0
    %291 = vmatpush2.msra.mxu0 0.0
    %292 = vmatprep.subr.mxu0 0.0
    %293 = vmatpush2.msra.mxu0 0.0
    %294 = vmatprep.subr.mxu0 0.0
    %295 = vmatpush2.msra.mxu0 0.0
    %296 = vmatprep.subr.mxu0 0.0
    %297 = vmatpush2.msra.mxu0 0.0
    %298 = vmatprep.subr.mxu0 0.0
    %299 = vmatpush2.msra.mxu0 0.0
    %300 = vmatprep.subr.mxu0 0.0
    %301 = vmatpush2.msra.mxu0 0.0
    %302 = vmatprep.subr.mxu0 0.0
    %303 = vmatpush2.msra.mxu0 0.0
    %304 = vmatprep.mubr.f32.mxu0 0.0
    %305 = vmatmul.mubr.f32.gmra.mxu0 %v235
    %v306 = vpop.f32.mrf.mxu0
    %v307 = vadd.f32 %v232, %v306
    %v308 = vpop.f32.mrf.mxu0
    %309 = vmatprep.mubr.f32.mxu0 0.0
    %310 = vmatmul.mubr.f32.gmra.mxu0 %v238
    %v311 = vpop.f32.mrf.mxu0
    %v312 = vadd.f32 %v232, %v311
    %v313 = vpop.f32.mrf.mxu0
    %314 = vdwg.mxu0
    %v315 = vmax.f32 %v307, 0.0
    %v316 = vmax.f32 %v312, 0.0
    %v317 = vld [vmem:[#allocation8] sm:$0xff]
    %v318 = vld [vmem:[#allocation8 + $0x8] sm:$0xff]
    %v319 = vld [vmem:[#allocation10] sm:$0x1]
    %v321 = vlaneseq
    %v322 = vshrl.u32 %v321, 7
    %v323 = vsub.s32 0, %v322
    %v324 = vrot.slane %v319, %v323
    %vm326 = vcmask 130048
    %v328 = vsel %vm326, %v315, 0
    %v331 = vsel %vm326, %v316, 0
    %333 = vmatprep.subr.mxu0 0.0
    %334 = vmatpush1.msra.mxu0 0.0
    %335 = vmatprep.subr.mxu0 0.0
    %336 = vmatpush1.msra.mxu0 0.0
    %337 = vmatprep.subr.mxu0 0.0
    %338 = vmatpush1.msra.mxu0 0.0
    %339 = vmatprep.subr.mxu0 0.0
    %340 = vmatpush1.msra.mxu0 0.0
    %341 = vmatprep.subr.mxu0 0.0
    %342 = vmatpush1.msra.mxu0 0.0
    %343 = vmatprep.subr.mxu0 0.0
    %344 = vmatpush1.msra.mxu0 0.0
    %345 = vmatprep.subr.mxu0 0.0
    %346 = vmatpush1.msra.mxu0 0.0
    %347 = vmatprep.subr.mxu0 0.0
    %348 = vmatpush1.msra.mxu0 0.0
    %349 = vmatprep.subr.mxu0 0.0
    %350 = vmatpush1.msra.mxu0 0.0
    %351 = vmatprep.subr.mxu0 0.0
    %352 = vmatpush1.msra.mxu0 0.0
    %353 = vmatprep.subr.mxu0 0.0
    %354 = vmatpush1.msra.mxu0 0.0
    %355 = vmatprep.subr.mxu0 0.0
    %356 = vmatpush1.msra.mxu0 0.0
    %357 = vmatprep.subr.mxu0 0.0
    %358 = vmatpush1.msra.mxu0 0.0
    %359 = vmatprep.subr.mxu0 0.0
    %360 = vmatpush1.msra.mxu0 0.0
    %361 = vmatprep.subr.mxu0 0.0
    %362 = vmatpush1.msra.mxu0 %v318
    %363 = vmatprep.subr.mxu0 0.0
    %364 = vmatpush1.msra.mxu0 %v317
    %365 = vmatprep.subr.mxu0 0.0
    %366 = vmatpush2.msra.mxu0 0.0
    %367 = vmatprep.subr.mxu0 0.0
    %368 = vmatpush2.msra.mxu0 0.0
    %369 = vmatprep.subr.mxu0 0.0
    %370 = vmatpush2.msra.mxu0 0.0
    %371 = vmatprep.subr.mxu0 0.0
    %372 = vmatpush2.msra.mxu0 0.0
    %373 = vmatprep.subr.mxu0 0.0
    %374 = vmatpush2.msra.mxu0 0.0
    %375 = vmatprep.subr.mxu0 0.0
    %376 = vmatpush2.msra.mxu0 0.0
    %377 = vmatprep.subr.mxu0 0.0
    %378 = vmatpush2.msra.mxu0 0.0
    %379 = vmatprep.subr.mxu0 0.0
    %380 = vmatpush2.msra.mxu0 0.0
    %381 = vmatprep.subr.mxu0 0.0
    %382 = vmatpush2.msra.mxu0 0.0
    %383 = vmatprep.subr.mxu0 0.0
    %384 = vmatpush2.msra.mxu0 0.0
    %385 = vmatprep.subr.mxu0 0.0
    %386 = vmatpush2.msra.mxu0 0.0
    %387 = vmatprep.subr.mxu0 0.0
    %388 = vmatpush2.msra.mxu0 0.0
    %389 = vmatprep.subr.mxu0 0.0
    %390 = vmatpush2.msra.mxu0 0.0
    %391 = vmatprep.subr.mxu0 0.0
    %392 = vmatpush2.msra.mxu0 0.0
    %393 = vmatprep.subr.mxu0 0.0
    %394 = vmatpush2.msra.mxu0 0.0
    %395 = vmatprep.subr.mxu0 0.0
    %396 = vmatpush2.msra.mxu0 0.0
    %397 = vmatprep.mubr.f32.mxu0 0.0
    %398 = vmatmul.mubr.f32.gmra.mxu0 %v328
    %v399 = vpop.f32.mrf.mxu0
    %v400 = vadd.f32 %v324, %v399
    %v401 = vpop.f32.mrf.mxu0
    %402 = vmatprep.mubr.f32.mxu0 0.0
    %403 = vmatmul.mubr.f32.gmra.mxu0 %v331
    %v404 = vpop.f32.mrf.mxu0
    %v405 = vadd.f32 %v324, %v404
    %v406 = vpop.f32.mrf.mxu0
    %407 = vdwg.mxu0
    %v408 = vmax.f32 %v400, 0.0
    %v409 = vmax.f32 %v405, 0.0
    %v410 = vld [vmem:[#allocation11] sm:$0xff]
    %v411 = vld [vmem:[#allocation11 + $0x8] sm:$0xff]
    %v412 = vld [vmem:[#allocation13] sm:$0x1]
    %v414 = vlaneseq
    %v415 = vshrl.u32 %v414, 7
    %v416 = vsub.s32 0, %v415
    %v417 = vrot.slane %v412, %v416
    %v420 = vsel %vm326, %v408, 0
    %v423 = vsel %vm326, %v409, 0
    %425 = vmatprep.subr.mxu0 0.0
    %426 = vmatpush1.msra.mxu0 0.0
    %427 = vmatprep.subr.mxu0 0.0
    %428 = vmatpush1.msra.mxu0 0.0
    %429 = vmatprep.subr.mxu0 0.0
    %430 = vmatpush1.msra.mxu0 0.0
    %431 = vmatprep.subr.mxu0 0.0
    %432 = vmatpush1.msra.mxu0 0.0
    %433 = vmatprep.subr.mxu0 0.0
    %434 = vmatpush1.msra.mxu0 0.0
    %435 = vmatprep.subr.mxu0 0.0
    %436 = vmatpush1.msra.mxu0 0.0
    %437 = vmatprep.subr.mxu0 0.0
    %438 = vmatpush1.msra.mxu0 0.0
    %439 = vmatprep.subr.mxu0 0.0
    %440 = vmatpush1.msra.mxu0 0.0
    %441 = vmatprep.subr.mxu0 0.0
    %442 = vmatpush1.msra.mxu0 0.0
    %443 = vmatprep.subr.mxu0 0.0
    %444 = vmatpush1.msra.mxu0 0.0
    %445 = vmatprep.subr.mxu0 0.0
    %446 = vmatpush1.msra.mxu0 0.0
    %447 = vmatprep.subr.mxu0 0.0
    %448 = vmatpush1.msra.mxu0 0.0
    %449 = vmatprep.subr.mxu0 0.0
    %450 = vmatpush1.msra.mxu0 0.0
    %451 = vmatprep.subr.mxu0 0.0
    %452 = vmatpush1.msra.mxu0 0.0
    %453 = vmatprep.subr.mxu0 0.0
    %454 = vmatpush1.msra.mxu0 %v411
    %455 = vmatprep.subr.mxu0 0.0
    %456 = vmatpush1.msra.mxu0 %v410
    %457 = vmatprep.subr.mxu0 0.0
    %458 = vmatpush2.msra.mxu0 0.0
    %459 = vmatprep.subr.mxu0 0.0
    %460 = vmatpush2.msra.mxu0 0.0
    %461 = vmatprep.subr.mxu0 0.0
    %462 = vmatpush2.msra.mxu0 0.0
    %463 = vmatprep.subr.mxu0 0.0
    %464 = vmatpush2.msra.mxu0 0.0
    %465 = vmatprep.subr.mxu0 0.0
    %466 = vmatpush2.msra.mxu0 0.0
    %467 = vmatprep.subr.mxu0 0.0
    %468 = vmatpush2.msra.mxu0 0.0
    %469 = vmatprep.subr.mxu0 0.0
    %470 = vmatpush2.msra.mxu0 0.0
    %471 = vmatprep.subr.mxu0 0.0
    %472 = vmatpush2.msra.mxu0 0.0
    %473 = vmatprep.subr.mxu0 0.0
    %474 = vmatpush2.msra.mxu0 0.0
    %475 = vmatprep.subr.mxu0 0.0
    %476 = vmatpush2.msra.mxu0 0.0
    %477 = vmatprep.subr.mxu0 0.0
    %478 = vmatpush2.msra.mxu0 0.0
    %479 = vmatprep.subr.mxu0 0.0
    %480 = vmatpush2.msra.mxu0 0.0
    %481 = vmatprep.subr.mxu0 0.0
    %482 = vmatpush2.msra.mxu0 0.0
    %483 = vmatprep.subr.mxu0 0.0
    %484 = vmatpush2.msra.mxu0 0.0
    %485 = vmatprep.subr.mxu0 0.0
    %486 = vmatpush2.msra.mxu0 0.0
    %487 = vmatprep.subr.mxu0 0.0
    %488 = vmatpush2.msra.mxu0 0.0
    %489 = vmatprep.mubr.f32.mxu0 0.0
    %490 = vmatmul.mubr.f32.gmra.mxu0 %v420
    %v491 = vpop.f32.mrf.mxu0
    %v492 = vadd.f32 %v417, %v491
    %v493 = vpop.f32.mrf.mxu0
    %494 = vmatprep.mubr.f32.mxu0 0.0
    %495 = vmatmul.mubr.f32.gmra.mxu0 %v423
    %v496 = vpop.f32.mrf.mxu0
    %v497 = vadd.f32 %v417, %v496
    %v498 = vpop.f32.mrf.mxu0
    %499 = vdwg.mxu0
    %v500 = vmax.f32 %v492, 0.0
    %v501 = vmax.f32 %v497, 0.0
    %v502 = vld [vmem:[%s9] sm:$0xff]
    %v503 = vld [vmem:[%s9 + $0x8] sm:$0xff]
    %v504 = vld [vmem:[%s9 + $0x10] sm:$0xff]
    %v505 = vld [vmem:[%s9 + $0x18] sm:$0xff]
    %v506 = vld [vmem:[%s10] sm:$0x1]
    %v508 = vlaneseq
    %v509 = vshrl.u32 %v508, 7
    %v510 = vsub.s32 0, %v509
    %v511 = vrot.slane %v506, %v510
    %v514 = vsel %vm139, %v500, 0
    %v517 = vsel %vm139, %v501, 0
    %519 = vmatprep.subr.mxu0 0.0
    %520 = vmatpush1.msra.mxu0 0.0
    %521 = vmatprep.subr.mxu0 0.0
    %522 = vmatpush1.msra.mxu0 0.0
    %523 = vmatprep.subr.mxu0 0.0
    %524 = vmatpush1.msra.mxu0 0.0
    %525 = vmatprep.subr.mxu0 0.0
    %526 = vmatpush1.msra.mxu0 0.0
    %527 = vmatprep.subr.mxu0 0.0
    %528 = vmatpush1.msra.mxu0 0.0
    %529 = vmatprep.subr.mxu0 0.0
    %530 = vmatpush1.msra.mxu0 0.0
    %531 = vmatprep.subr.mxu0 0.0
    %532 = vmatpush1.msra.mxu0 0.0
    %533 = vmatprep.subr.mxu0 0.0
    %534 = vmatpush1.msra.mxu0 0.0
    %535 = vmatprep.subr.mxu0 0.0
    %536 = vmatpush1.msra.mxu0 0.0
    %537 = vmatprep.subr.mxu0 0.0
    %538 = vmatpush1.msra.mxu0 0.0
    %539 = vmatprep.subr.mxu0 0.0
    %540 = vmatpush1.msra.mxu0 0.0
    %541 = vmatprep.subr.mxu0 0.0
    %542 = vmatpush1.msra.mxu0 0.0
    %543 = vmatprep.subr.mxu0 0.0
    %544 = vmatpush1.msra.mxu0 %v505
    %545 = vmatprep.subr.mxu0 0.0
    %546 = vmatpush1.msra.mxu0 %v504
    %547 = vmatprep.subr.mxu0 0.0
    %548 = vmatpush1.msra.mxu0 %v503
    %549 = vmatprep.subr.mxu0 0.0
    %550 = vmatpush1.msra.mxu0 %v502
    %551 = vmatprep.subr.mxu0 0.0
    %552 = vmatpush2.msra.mxu0 0.0
    %553 = vmatprep.subr.mxu0 0.0
    %554 = vmatpush2.msra.mxu0 0.0
    %555 = vmatprep.subr.mxu0 0.0
    %556 = vmatpush2.msra.mxu0 0.0
    %557 = vmatprep.subr.mxu0 0.0
    %558 = vmatpush2.msra.mxu0 0.0
    %559 = vmatprep.subr.mxu0 0.0
    %560 = vmatpush2.msra.mxu0 0.0
    %561 = vmatprep.subr.mxu0 0.0
    %562 = vmatpush2.msra.mxu0 0.0
    %563 = vmatprep.subr.mxu0 0.0
    %564 = vmatpush2.msra.mxu0 0.0
    %565 = vmatprep.subr.mxu0 0.0
    %566 = vmatpush2.msra.mxu0 0.0
    %567 = vmatprep.subr.mxu0 0.0
    %568 = vmatpush2.msra.mxu0 0.0
    %569 = vmatprep.subr.mxu0 0.0
    %570 = vmatpush2.msra.mxu0 0.0
    %571 = vmatprep.subr.mxu0 0.0
    %572 = vmatpush2.msra.mxu0 0.0
    %573 = vmatprep.subr.mxu0 0.0
    %574 = vmatpush2.msra.mxu0 0.0
    %575 = vmatprep.subr.mxu0 0.0
    %576 = vmatpush2.msra.mxu0 0.0
    %577 = vmatprep.subr.mxu0 0.0
    %578 = vmatpush2.msra.mxu0 0.0
    %579 = vmatprep.subr.mxu0 0.0
    %580 = vmatpush2.msra.mxu0 0.0
    %581 = vmatprep.subr.mxu0 0.0
    %582 = vmatpush2.msra.mxu0 0.0
    %583 = vmatprep.mubr.f32.mxu0 0.0
    %584 = vmatmul.mubr.f32.gmra.mxu0 %v514
    %v585 = vpop.f32.mrf.mxu0
    %v586 = vadd.f32 %v511, %v585
    %v587 = vpop.f32.mrf.mxu0
    %588 = vmatprep.mubr.f32.mxu0 0.0
    %589 = vmatmul.mubr.f32.gmra.mxu0 %v517
    %v590 = vpop.f32.mrf.mxu0
    %v591 = vadd.f32 %v511, %v590
    %v592 = vpop.f32.mrf.mxu0
    %593 = vdwg.mxu0
    %594 = vst.msk [vmem:[#allocation14] sm:$0xff] %vm139, %v586
    %595 = vst.msk [vmem:[#allocation14 + $0x8] sm:$0xff] %vm139, %v591
    // Predicated region
    $region74: #{tpu_custom_call.1} parent=1 // pred_check
      _
    $region75: #{tpu_custom_call.1} parent=1 // pred_check_branch
      %597 = sbr.rel (0) target = $region77
    $region76: #{tpu_custom_call.1} parent=1 // pred_region
      %s599 = ssub.s32 256, 256
      %600 = vsyncadd [#allocation4], %s599
      %s601 = sshll.u32 [#allocation14], 4
      %s602 = int_to_ptr.vmem [resolvable:$true] %s601
      %607 = dma.vmem_to_hbm [thread:$0]  %s602, 256, %s11, [#allocation4], 128, 128, 8
    $region77: #{tpu_custom_call.1} parent=1 // pred_fallthru
      _
    // Predicated region
    $region78: #{tpu_custom_call.1} parent=1 // pred_check
      _
    $region79: #{tpu_custom_call.1} parent=1 // pred_check_branch
      %609 = sbr.rel (0) target = $region81
    $region80: #{tpu_custom_call.1} parent=1 // pred_region
      %610 = dma.done [#allocation4], 256
    $region81: #{tpu_custom_call.1} parent=1 // pred_fallthru
      _
    %611 = vsyncpa [#allocation3], 1
    %612 = vsyncpa [#allocation6], 1
    %613 = vsyncpa [#allocation9], 1
    %614 = vsyncpa [#allocation12], 1
    %615 = vsyncpa [#allocation4], 1

</llo_original>
